<compile_context>
chip_gen: v7x
topology: tpu7x:2x2x1
jax: 0.10.0
libtpu: 0.0.40
codegen_flags: <defaults>
</compile_context>

<pallas_src>
import functools

import jax
import jax.numpy as jnp
from jax.experimental import pallas as pl
from jax.experimental.pallas import tpu as pltpu


def _critic_kernel(obs_ref, act_ref,          # (TILE_B, obs_dim) f32, (TILE_B, act_dim) f32
                   wobs_ref, wact_ref,        # (obs_dim, 256) bf16, (act_dim, 256) bf16  (fc1 folded)
                   b1_ref,                    # (1, 256) f32   (b_obs+b_act folded through fc1)
                   w2_ref, b2_ref,            # (256, 64) bf16, (1, 64) f32   (bn1 folded)
                   wout_ref, bout_ref,        # (1, 64) f32,   (1, 1) f32     (bn2 folded)
                   out_ref):                  # (TILE_B, 1) f32
    bf16 = jnp.bfloat16
    # obs_fc/act_fc + merge_fc1 fused (exact: no nonlinearity between them).
    a = (jnp.dot(obs_ref[...].astype(bf16), wobs_ref[...],
                 preferred_element_type=jnp.float32)
         + jnp.dot(act_ref[...].astype(bf16), wact_ref[...],
                   preferred_element_type=jnp.float32)
         + b1_ref[...])
    a = jnp.maximum(a, 0.0)                                   # relu
    # bn1-folded merge_fc2 + tanh   (dropout is identity in eval mode)
    a = jnp.dot(a.astype(bf16), w2_ref[...],
                preferred_element_type=jnp.float32) + b2_ref[...]
    a = jnp.tanh(a)
    # bn2-folded output layer (64 -> 1): VPU multiply + XLU lane reduction.
    out_ref[...] = jnp.sum(a * wout_ref[...], axis=-1, keepdims=True) + bout_ref[...]


def critic_forward(observation, action, params, *, tile_b=4096):
    """observation: (B, obs_dim) f32, action: (B, act_dim) f32 -> (B, 1) f32."""
    B, obs_dim = observation.shape
    act_dim = action.shape[1]
    eps = 1e-5
    f32, bf16 = jnp.float32, jnp.bfloat16

    # ---- parameter glue (runs once under jit; not kernel work) -------------
    # Fold BatchNorm (eval) into affine scale/shift.
    s1 = params["bn1_gamma"] / jnp.sqrt(params["bn1_var"] + eps)
    sh1 = params["bn1_beta"] - params["bn1_mean"] * s1
    s2 = params["bn2_gamma"] / jnp.sqrt(params["bn2_var"] + eps)
    sh2 = params["bn2_beta"] - params["bn2_mean"] * s2

    # Fold bn1 into merge_fc2, bn2 into the output layer.
    w2f = s1[:, None] * params["w2"]                      # (256, 64)
    b2f = sh1 @ params["w2"] + params["b2"]               # (64,)
    woutf = s2[:, None] * params["w_out"]                 # (64, 1)
    boutf = sh2 @ params["w_out"] + params["b_out"]       # (1,)

    # Fold obs_fc / act_fc into merge_fc1 (exact: no nonlinearity in between).
    wobs_f = params["w_obs"] @ params["w1"]               # (obs_dim, 256)
    wact_f = params["w_act"] @ params["w1"]               # (act_dim, 256)
    b1_f = (params["b_obs"] + params["b_act"]) @ params["w1"] + params["b1"]  # (256,)

    # ---- tiling -------------------------------------------------------------
    def round_up(v, m):
        return ((v + m - 1) // m) * m

    Bp8 = round_up(B, 8)
    # Big tiles (per-step overhead amortization), but keep nb >= 2 when the
    # batch allows it so both v7x TensorCores get work.
    half = max(8, round_up(pl.cdiv(Bp8, 2), 8))
    TILE_B = min(tile_b, half)
    nb = pl.cdiv(B, TILE_B)

    row = lambda v: v.reshape(1, -1).astype(f32)
    operands = (
        observation.astype(f32), action.astype(f32),
        wobs_f.astype(bf16), wact_f.astype(bf16), row(b1_f),
        w2f.astype(bf16), row(b2f),
        woutf.reshape(1, -1).astype(f32), boutf.reshape(1, 1).astype(f32),
    )

    # ---- BlockSpecs ---------------------------------------------------------
    obs_spec = pl.BlockSpec((TILE_B, obs_dim), lambda i: (i, 0))
    act_spec = pl.BlockSpec((TILE_B, act_dim), lambda i: (i, 0))
    const_spec = lambda a: pl.BlockSpec(a.shape, lambda i: (0,) * a.ndim)
    in_specs = [obs_spec, act_spec] + [const_spec(a) for a in operands[2:]]
    out_spec = pl.BlockSpec((TILE_B, 1), lambda i: (i, 0))

    # ---- cost estimate (scheduling hint only) -------------------------------
    K = obs_dim + act_dim
    flops = 2 * B * (K * 256 + 256 * 64 + 64)
    transcendentals = B * 64                               # tanh
    weight_bytes = (K * 256 * 2 + 256 * 4 + 256 * 64 * 2 + 64 * 4 + 64 * 4 + 4)
    bytes_accessed = B * (K * 4 + 4) + weight_bytes

    out = pl.pallas_call(
        _critic_kernel,
        out_shape=jax.ShapeDtypeStruct((B, 1), f32),
        grid=(nb,),
        in_specs=in_specs,
        out_specs=out_spec,
        compiler_params=pltpu.CompilerParams(
            dimension_semantics=("parallel",)),
        cost_estimate=pl.CostEstimate(
            flops=flops,
            transcendentals=transcendentals,
            bytes_accessed=bytes_accessed),
    )(*operands)

    return out


def init_params(key, observation_dim, action_dim):
    """Deterministic init mirroring the PyTorch module's parameter shapes.

    Linear weights stored transposed as (in, out) so the kernel does x @ W.
    """
    def linear(k, fan_in, fan_out):
        kw, kb = jax.random.split(k)
        bound = 1.0 / jnp.sqrt(fan_in)
        w = jax.random.uniform(kw, (fan_in, fan_out), jnp.float32, -bound, bound)
        b = jax.random.uniform(kb, (fan_out,), jnp.float32, -bound, bound)
        return w, b

    ks = jax.random.split(key, 5)
    w_obs, b_obs = linear(ks[0], observation_dim, 128)
    w_act, b_act = linear(ks[1], action_dim, 128)
    w1, b1 = linear(ks[2], 128, 256)
    w2, b2 = linear(ks[3], 256, 64)
    w_out, b_out = linear(ks[4], 64, 1)

    return dict(
        w_obs=w_obs, b_obs=b_obs,
        w_act=w_act, b_act=b_act,
        w1=w1, b1=b1,
        bn1_gamma=jnp.ones((256,), jnp.float32), bn1_beta=jnp.zeros((256,), jnp.float32),
        bn1_mean=jnp.zeros((256,), jnp.float32), bn1_var=jnp.ones((256,), jnp.float32),
        w2=w2, b2=b2,
        bn2_gamma=jnp.ones((64,), jnp.float32), bn2_beta=jnp.zeros((64,), jnp.float32),
        bn2_mean=jnp.zeros((64,), jnp.float32), bn2_var=jnp.ones((64,), jnp.float32),
        w_out=w_out, b_out=b_out,
    )


def reference_forward(observation, action, params):
    """Pure-JAX f32 reference matching the PyTorch eval-mode forward."""
    eps = 1e-5
    a = (observation @ params["w_obs"] + params["b_obs"]) + \
        (action @ params["w_act"] + params["b_act"])
    a = jnp.maximum(a @ params["w1"] + params["b1"], 0.0)
    a = (a - params["bn1_mean"]) / jnp.sqrt(params["bn1_var"] + eps) * \
        params["bn1_gamma"] + params["bn1_beta"]
    a = jnp.tanh(a @ params["w2"] + params["b2"])
    # dropout(p=0.3) is identity in eval mode
    a = (a - params["bn2_mean"]) / jnp.sqrt(params["bn2_var"] + eps) * \
        params["bn2_gamma"] + params["bn2_beta"]
    return a @ params["w_out"] + params["b_out"]


if __name__ == "__main__":
    key = jax.random.PRNGKey(0)
    k_obs, k_act, k_par = jax.random.split(key, 3)

    B, OBS_DIM, ACT_DIM = 8, 16, 4
    observation = jax.random.normal(k_obs, (B, OBS_DIM), jnp.float32)
    action = jax.random.normal(k_act, (B, ACT_DIM), jnp.float32)
    params = init_params(k_par, OBS_DIM, ACT_DIM)

    fwd = jax.jit(functools.partial(critic_forward, tile_b=4096))
    out = fwd(observation, action, params)
    out = jax.block_until_ready(out)

    ref = reference_forward(observation, action, params)
    assert out.shape == (B, 1)
    # bf16 MXU operands (incl. the folded fc1 weights) vs f32 reference.
    assert jnp.allclose(out, ref, atol=2e-2, rtol=2e-2), \
        f"max abs diff {jnp.max(jnp.abs(out - ref))}"

    print("KERNEL_OK")
</pallas_src>

<mosaic_0001>
module attributes {stable_mosaic.version = 11 : i64} {
  func.func @_critic_kernel(%arg0: i32, %arg1: memref<8x16xf32, #tpu.memory_space<vmem>>, %arg2: memref<8x4xf32, #tpu.memory_space<vmem>>, %arg3: memref<16x256xbf16, #tpu.memory_space<vmem>>, %arg4: memref<4x256xbf16, #tpu.memory_space<vmem>>, %arg5: memref<1x256xf32, #tpu.memory_space<vmem>>, %arg6: memref<256x64xbf16, #tpu.memory_space<vmem>>, %arg7: memref<1x64xf32, #tpu.memory_space<vmem>>, %arg8: memref<1x64xf32, #tpu.memory_space<vmem>>, %arg9: memref<1x1xf32, #tpu.memory_space<vmem>>, %arg10: memref<8x1xf32, #tpu.memory_space<vmem>>) attributes {dimension_semantics = [#tpu.dimension_semantics<parallel>], iteration_bounds = array<i64: 1>, scalar_prefetch = 0 : i64, scratch_operands = 0 : i64, tpu.core_type = #tpu.core_type<tc>, window_params = [{transform_indices = @transform_0, window_bounds = array<i64: 8, 16>}, {transform_indices = @transform_1, window_bounds = array<i64: 8, 4>}, {pipeline_mode = #tpu.pipeline_mode<synchronous>, transform_indices = @transform_2, window_bounds = array<i64: 16, 256>}, {pipeline_mode = #tpu.pipeline_mode<synchronous>, transform_indices = @transform_3, window_bounds = array<i64: 4, 256>}, {pipeline_mode = #tpu.pipeline_mode<synchronous>, transform_indices = @transform_4, window_bounds = array<i64: 1, 256>}, {pipeline_mode = #tpu.pipeline_mode<synchronous>, transform_indices = @transform_5, window_bounds = array<i64: 256, 64>}, {pipeline_mode = #tpu.pipeline_mode<synchronous>, transform_indices = @transform_6, window_bounds = array<i64: 1, 64>}, {pipeline_mode = #tpu.pipeline_mode<synchronous>, transform_indices = @transform_7, window_bounds = array<i64: 1, 64>}, {pipeline_mode = #tpu.pipeline_mode<synchronous>, transform_indices = @transform_8, window_bounds = array<i64: 1, 1>}, {transform_indices = @transform_9, window_bounds = array<i64: 8, 1>}]} {
    %c0 = arith.constant 0 : index
    %c0_0 = arith.constant 0 : index
    %0 = vector.load %arg1[%c0, %c0_0] : memref<8x16xf32, #tpu.memory_space<vmem>>, vector<8x16xf32>
    %1 = arith.truncf %0 : vector<8x16xf32> to vector<8x16xbf16>
    %c0_1 = arith.constant 0 : index
    %c0_2 = arith.constant 0 : index
    %2 = vector.load %arg3[%c0_1, %c0_2] : memref<16x256xbf16, #tpu.memory_space<vmem>>, vector<16x256xbf16>
    %cst = arith.constant dense<0.000000e+00> : vector<8x256xf32>
    %3 = tpu.matmul %1, %2, %cst {dimension_numbers = #tpu.dot_dimension_numbers<[1], [0], [0], [1], [0, 0, 1, 1], [], []>} : vector<8x16xbf16>, vector<16x256xbf16>, vector<8x256xf32> -> vector<8x256xf32>
    %c0_3 = arith.constant 0 : index
    %c0_4 = arith.constant 0 : index
    %4 = vector.load %arg2[%c0_3, %c0_4] : memref<8x4xf32, #tpu.memory_space<vmem>>, vector<8x4xf32>
    %5 = arith.truncf %4 : vector<8x4xf32> to vector<8x4xbf16>
    %c0_5 = arith.constant 0 : index
    %c0_6 = arith.constant 0 : index
    %6 = vector.load %arg4[%c0_5, %c0_6] : memref<4x256xbf16, #tpu.memory_space<vmem>>, vector<4x256xbf16>
    %cst_7 = arith.constant dense<0.000000e+00> : vector<8x256xf32>
    %7 = tpu.matmul %5, %6, %cst_7 {dimension_numbers = #tpu.dot_dimension_numbers<[1], [0], [0], [1], [0, 0, 1, 1], [], []>} : vector<8x4xbf16>, vector<4x256xbf16>, vector<8x256xf32> -> vector<8x256xf32>
    %8 = arith.addf %3, %7 : vector<8x256xf32>
    %c0_8 = arith.constant 0 : index
    %c0_9 = arith.constant 0 : index
    %9 = vector.load %arg5[%c0_8, %c0_9] : memref<1x256xf32, #tpu.memory_space<vmem>>, vector<1x256xf32>
    %10 = vector.broadcast %9 : vector<1x256xf32> to vector<8x256xf32>
    %11 = arith.addf %8, %10 : vector<8x256xf32>
    %cst_10 = arith.constant 0.000000e+00 : f32
    %12 = vector.broadcast %cst_10 : f32 to vector<8x256xf32>
    %13 = arith.maximumf %11, %12 : vector<8x256xf32>
    %14 = arith.truncf %13 : vector<8x256xf32> to vector<8x256xbf16>
    %c0_11 = arith.constant 0 : index
    %c0_12 = arith.constant 0 : index
    %15 = vector.load %arg6[%c0_11, %c0_12] : memref<256x64xbf16, #tpu.memory_space<vmem>>, vector<256x64xbf16>
    %cst_13 = arith.constant dense<0.000000e+00> : vector<8x64xf32>
    %16 = tpu.matmul %14, %15, %cst_13 {dimension_numbers = #tpu.dot_dimension_numbers<[1], [0], [0], [1], [0, 0, 1, 1], [], []>} : vector<8x256xbf16>, vector<256x64xbf16>, vector<8x64xf32> -> vector<8x64xf32>
    %c0_14 = arith.constant 0 : index
    %c0_15 = arith.constant 0 : index
    %17 = vector.load %arg7[%c0_14, %c0_15] : memref<1x64xf32, #tpu.memory_space<vmem>>, vector<1x64xf32>
    %18 = vector.broadcast %17 : vector<1x64xf32> to vector<8x64xf32>
    %19 = arith.addf %16, %18 : vector<8x64xf32>
    %20 = math.tanh %19 : vector<8x64xf32>
    %c0_16 = arith.constant 0 : index
    %c0_17 = arith.constant 0 : index
    %21 = vector.load %arg8[%c0_16, %c0_17] : memref<1x64xf32, #tpu.memory_space<vmem>>, vector<1x64xf32>
    %22 = vector.broadcast %21 : vector<1x64xf32> to vector<8x64xf32>
    %23 = arith.mulf %20, %22 : vector<8x64xf32>
    %cst_18 = arith.constant dense<0.000000e+00> : vector<8xf32>
    %24 = vector.multi_reduction <add>, %23, %cst_18 [1] : vector<8x64xf32> to vector<8xf32>
    %25 = vector.shape_cast %24 : vector<8xf32> to vector<8x1xf32>
    %c0_19 = arith.constant 0 : index
    %c0_20 = arith.constant 0 : index
    %26 = vector.load %arg9[%c0_19, %c0_20] : memref<1x1xf32, #tpu.memory_space<vmem>>, vector<1x1xf32>
    %27 = vector.broadcast %26 : vector<1x1xf32> to vector<8x1xf32>
    %28 = arith.addf %25, %27 : vector<8x1xf32>
    %c0_21 = arith.constant 0 : index
    %c0_22 = arith.constant 0 : index
    %29 = vector.load %arg10[%c0_21, %c0_22] : memref<8x1xf32, #tpu.memory_space<vmem>>, vector<8x1xf32>
    tpu.vector_store %arg10[%c0_21, %c0_22], %28 {strides = array<i32>} : memref<8x1xf32, #tpu.memory_space<vmem>>, vector<8x1xf32>,
    return
  }
  func.func @transform_0(%arg0: i32) -> (i32, i32) {
    %c0_i32 = arith.constant 0 : i32
    %c0_i32_0 = arith.constant 0 : i32
    return %arg0, %c0_i32 : i32, i32
  }
  func.func @transform_1(%arg0: i32) -> (i32, i32) {
    %c0_i32 = arith.constant 0 : i32
    %c0_i32_0 = arith.constant 0 : i32
    return %arg0, %c0_i32 : i32, i32
  }
  func.func @transform_2(%arg0: i32) -> (i32, i32) {
    %c0_i32 = arith.constant 0 : i32
    %c0_i32_0 = arith.constant 0 : i32
    %c0_i32_1 = arith.constant 0 : i32
    return %c0_i32, %c0_i32_0 : i32, i32
  }
  func.func @transform_3(%arg0: i32) -> (i32, i32) {
    %c0_i32 = arith.constant 0 : i32
    %c0_i32_0 = arith.constant 0 : i32
    %c0_i32_1 = arith.constant 0 : i32
    return %c0_i32, %c0_i32_0 : i32, i32
  }
  func.func @transform_4(%arg0: i32) -> (i32, i32) {
    %c0_i32 = arith.constant 0 : i32
    %c0_i32_0 = arith.constant 0 : i32
    %c0_i32_1 = arith.constant 0 : i32
    return %c0_i32, %c0_i32_0 : i32, i32
  }
  func.func @transform_5(%arg0: i32) -> (i32, i32) {
    %c0_i32 = arith.constant 0 : i32
    %c0_i32_0 = arith.constant 0 : i32
    %c0_i32_1 = arith.constant 0 : i32
    return %c0_i32, %c0_i32_0 : i32, i32
  }
  func.func @transform_6(%arg0: i32) -> (i32, i32) {
    %c0_i32 = arith.constant 0 : i32
    %c0_i32_0 = arith.constant 0 : i32
    %c0_i32_1 = arith.constant 0 : i32
    return %c0_i32, %c0_i32_0 : i32, i32
  }
  func.func @transform_7(%arg0: i32) -> (i32, i32) {
    %c0_i32 = arith.constant 0 : i32
    %c0_i32_0 = arith.constant 0 : i32
    %c0_i32_1 = arith.constant 0 : i32
    return %c0_i32, %c0_i32_0 : i32, i32
  }
  func.func @transform_8(%arg0: i32) -> (i32, i32) {
    %c0_i32 = arith.constant 0 : i32
    %c0_i32_0 = arith.constant 0 : i32
    %c0_i32_1 = arith.constant 0 : i32
    return %c0_i32, %c0_i32_0 : i32, i32
  }
  func.func @transform_9(%arg0: i32) -> (i32, i32) {
    %c0_i32 = arith.constant 0 : i32
    %c0_i32_0 = arith.constant 0 : i32
    return %arg0, %c0_i32 : i32, i32
  }
}

</mosaic_0001>

<llo_original>
// kernel: critic_forward.1
$region0: #{critic_forward.1}
  #allocation0 [shape = 'u32[]', space=smem, size = 0x4, offset = 0x4, fixed_abs, tag = 'smem constant byte address 0x4 - core index']
  #allocation1 [shape = 'u32[144,128]{1,0:T(1,128)}', space=vmem, size = 0x12000, scoped, tag = 'internal scratch']
  #allocation2 [shape = 'f32[1,1]{1,0:T(1,128)S(1)}', space=vmem, size = 0x200, scoped, tag = 'scoped memory for critic_forward.1']
  %s0 = inlined_call_operand.vmem [shape: f32[8,16], index: 0, kind: input, shape index: {}]
  %s1 = inlined_call_operand.vmem [shape: f32[8,4], index: 1, kind: input, shape index: {}]
  %s2 = inlined_call_operand.vmem [shape: bf16[16,256], index: 2, kind: input, shape index: {}]
  %s3 = inlined_call_operand.vmem [shape: bf16[4,256], index: 3, kind: input, shape index: {}]
  %s4 = inlined_call_operand.vmem [shape: f32[1,256], index: 4, kind: input, shape index: {}]
  %s5 = inlined_call_operand.vmem [shape: bf16[256,64], index: 5, kind: input, shape index: {}]
  %s6 = inlined_call_operand.vmem [shape: f32[1,64], index: 6, kind: input, shape index: {}]
  %s7 = inlined_call_operand.vmem [shape: f32[1,64], index: 7, kind: input, shape index: {}]
  %s8 = inlined_call_operand.<no memory space> [shape: f32[1,1], index: 8, kind: input, shape index: {}]
  %s9 = inlined_call_operand.vmem [shape: f32[8,1], index: 9, kind: output, shape index: {}]
  %s10 = sld [smem:[#allocation0]]
  $region46: #{critic_forward.1} parent=0
    _
  %s12 = ssub.s32 1, %s10
  %s13 = scalar_select 0, %s12, %s10
  %v14 = vstv %s8
  %15 = vst [vmem:[#allocation2] sm:$0x1] %v14
  // Predicated region
  $region2: #{critic_forward.1} parent=0 // pred_check
    _
  $region3: #{critic_forward.1} parent=0 // pred_check_branch
    %17 = sbr.rel (0) target = $region5
  $region4: #{critic_forward.1} parent=0 // pred_region
    _
  $region5: #{critic_forward.1} parent=0 // pred_fallthru
    _
  // Predicated region
  $region6: #{critic_forward.1} parent=0 // pred_check
    _
  $region7: #{critic_forward.1} parent=0 // pred_check_branch
    %19 = sbr.rel (0) target = $region9
  $region8: #{critic_forward.1} parent=0 // pred_region
    _
  $region9: #{critic_forward.1} parent=0 // pred_fallthru
    _
  // Predicated region
  $region10: #{critic_forward.1} parent=0 // pred_check
    _
  $region11: #{critic_forward.1} parent=0 // pred_check_branch
    %21 = sbr.rel (0) target = $region13
  $region12: #{critic_forward.1} parent=0 // pred_region
    _
  $region13: #{critic_forward.1} parent=0 // pred_fallthru
    _
  // Predicated region
  $region14: #{critic_forward.1} parent=0 // pred_check
    _
  $region15: #{critic_forward.1} parent=0 // pred_check_branch
    %23 = sbr.rel (0) target = $region17
  $region16: #{critic_forward.1} parent=0 // pred_region
    _
  $region17: #{critic_forward.1} parent=0 // pred_fallthru
    _
  // Predicated region
  $region18: #{critic_forward.1} parent=0 // pred_check
    _
  $region19: #{critic_forward.1} parent=0 // pred_check_branch
    %25 = sbr.rel (0) target = $region21
  $region20: #{critic_forward.1} parent=0 // pred_region
    _
  $region21: #{critic_forward.1} parent=0 // pred_fallthru
    _
  // Predicated region
  $region22: #{critic_forward.1} parent=0 // pred_check
    _
  $region23: #{critic_forward.1} parent=0 // pred_check_branch
    %27 = sbr.rel (0) target = $region25
  $region24: #{critic_forward.1} parent=0 // pred_region
    _
  $region25: #{critic_forward.1} parent=0 // pred_fallthru
    _
  // Predicated region
  $region26: #{critic_forward.1} parent=0 // pred_check
    _
  $region27: #{critic_forward.1} parent=0 // pred_check_branch
    %29 = sbr.rel (0) target = $region29
  $region28: #{critic_forward.1} parent=0 // pred_region
    _
  $region29: #{critic_forward.1} parent=0 // pred_fallthru
    _
  // Predicated region
  $region30: #{critic_forward.1} parent=0 // pred_check
    _
  $region31: #{critic_forward.1} parent=0 // pred_check_branch
    %31 = sbr.rel (0) target = $region33
  $region32: #{critic_forward.1} parent=0 // pred_region
    _
  $region33: #{critic_forward.1} parent=0 // pred_fallthru
    _
  // Predicated region
  $region34: #{critic_forward.1} parent=0 // pred_check
    _
  $region35: #{critic_forward.1} parent=0 // pred_check_branch
    %33 = sbr.rel (0) target = $region37
  $region36: #{critic_forward.1} parent=0 // pred_region
    _
  $region37: #{critic_forward.1} parent=0 // pred_fallthru
    _
  %v35 = vld [vmem:[%s0] sm:$0xff]
  %v36 = vpack.c.bf16 %v35, %v35
  %v37 = vld [vmem:[%s2] sm:$0xff]
  %v38 = vld [vmem:[%s2 + $0x8] sm:$0xff]
  %v39 = vld [vmem:[%s1] sm:$0xff]
  %v40 = vpack.c.bf16 %v39, %v39
  %v41 = vld [vmem:[%s3] sm:$0xf]
  %v44 = vunpack.c.l.s4 1983009808
  %v45 = vunpack.c.0.s8 %v44
  %v46 = vlaneseq
  %v47 = vshrl.u32 %v46, 7
  %v48 = vsub.s32 %v45, %v47
  %v49 = vrot.slane %v41, %v48
  %v50 = vcombine.high %v49, %v49
  %vm51 = vcmask 31744
  %v53 = vsel %vm51, %v40, 0
  %vm55 = vcmask 1041408
  %v57 = vsel %vm55, %v49, 0
  %v60 = vsel %vm55, %v50, 0
  %62 = vmatprep.subr.bf16.mxu0 %v60
  %63 = vmatpush1.bf16.msra.mxu0 %v57
  %64 = vmatprep.subr.bf16.mxu0 0
  %65 = vmatpush1.bf16.msra.mxu0 0
  %66 = vmatprep.subr.bf16.mxu0 0
  %67 = vmatpush1.bf16.msra.mxu0 0
  %68 = vmatprep.subr.bf16.mxu0 0
  %69 = vmatpush1.bf16.msra.mxu0 0
  %70 = vmatprep.subr.bf16.mxu0 0
  %71 = vmatpush1.bf16.msra.mxu0 0
  %72 = vmatprep.subr.bf16.mxu0 0
  %73 = vmatpush1.bf16.msra.mxu0 0
  %74 = vmatprep.subr.bf16.mxu0 0
  %75 = vmatpush1.bf16.msra.mxu0 0
  %76 = vmatprep.subr.bf16.mxu0 0
  %77 = vmatpush1.bf16.msra.mxu0 0
  %78 = vmatprep.subr.bf16.mxu0 0
  %79 = vmatpush1.bf16.msra.mxu0 0
  %80 = vmatprep.subr.bf16.mxu0 0
  %81 = vmatpush1.bf16.msra.mxu0 0
  %82 = vmatprep.subr.bf16.mxu0 0
  %83 = vmatpush1.bf16.msra.mxu0 0
  %84 = vmatprep.subr.bf16.mxu0 0
  %85 = vmatpush1.bf16.msra.mxu0 0
  %86 = vmatprep.subr.bf16.mxu0 0
  %87 = vmatpush1.bf16.msra.mxu0 0
  %88 = vmatprep.subr.bf16.mxu0 0
  %89 = vmatpush1.bf16.msra.mxu0 0
  %90 = vmatprep.subr.bf16.mxu0 0
  %91 = vmatpush1.bf16.msra.mxu0 0
  %92 = vmatprep.subr.bf16.mxu0 0
  %93 = vmatpush1.bf16.msra.mxu0 0
  %94 = vmatprep.mubr.bf16.mxu0 0
  %95 = vmatmul.mubr.bf16.gmra.mrb[0].mxu0 %v53
  %v96 = vpop.f32.mrb[0].mxu0
  %v97 = vadd.f32 0.0, %v96
  %v98 = vpop.f32.mrb[0].mxu0
  %v99 = vadd.f32 0.0, %v98
  %v100 = vpop.f32.mrb[0].mxu0
  %v101 = vpop.f32.mrb[0].mxu0
  %102 = vdwg.mxu0
  %v105 = vunpack.c.l.b16 %v37
  %v106 = vunpack.c.h.b16 %v37
  %v107 = vunpack.c.l.b16 %v38
  %v108 = vunpack.c.h.b16 %v38
  %v109 = vpack.c.b16 %v107, %v105
  %v110 = vpack.c.b16 %v108, %v106
  %vm113 = vcmask 130048
  %v115 = vsel %vm113, %v36, 0
  %117 = vmatprep.subr.bf16.mxu0 %v110
  %118 = vmatpush1.bf16.msra.mxu0 %v109
  %119 = vmatprep.subr.bf16.mxu0 0
  %120 = vmatpush1.bf16.msra.mxu0 0
  %121 = vmatprep.subr.bf16.mxu0 0
  %122 = vmatpush1.bf16.msra.mxu0 0
  %123 = vmatprep.subr.bf16.mxu0 0
  %124 = vmatpush1.bf16.msra.mxu0 0
  %125 = vmatprep.subr.bf16.mxu0 0
  %126 = vmatpush1.bf16.msra.mxu0 0
  %127 = vmatprep.subr.bf16.mxu0 0
  %128 = vmatpush1.bf16.msra.mxu0 0
  %129 = vmatprep.subr.bf16.mxu0 0
  %130 = vmatpush1.bf16.msra.mxu0 0
  %131 = vmatprep.subr.bf16.mxu0 0
  %132 = vmatpush1.bf16.msra.mxu0 0
  %133 = vmatprep.subr.bf16.mxu0 0
  %134 = vmatpush1.bf16.msra.mxu0 0
  %135 = vmatprep.subr.bf16.mxu0 0
  %136 = vmatpush1.bf16.msra.mxu0 0
  %137 = vmatprep.subr.bf16.mxu0 0
  %138 = vmatpush1.bf16.msra.mxu0 0
  %139 = vmatprep.subr.bf16.mxu0 0
  %140 = vmatpush1.bf16.msra.mxu0 0
  %141 = vmatprep.subr.bf16.mxu0 0
  %142 = vmatpush1.bf16.msra.mxu0 0
  %143 = vmatprep.subr.bf16.mxu0 0
  %144 = vmatpush1.bf16.msra.mxu0 0
  %145 = vmatprep.subr.bf16.mxu0 0
  %146 = vmatpush1.bf16.msra.mxu0 0
  %147 = vmatprep.subr.bf16.mxu0 0
  %148 = vmatpush1.bf16.msra.mxu0 0
  %149 = vmatprep.mubr.bf16.mxu0 0
  %150 = vmatmul.mubr.bf16.gmra.mrb[0].mxu0 %v115
  %v151 = vpop.f32.mrb[0].mxu0
  %v152 = vadd.f32 %v97, %v151
  %v153 = vpop.f32.mrb[0].mxu0
  %v154 = vadd.f32 %v99, %v153
  %v155 = vpop.f32.mrb[0].mxu0
  %v156 = vpop.f32.mrb[0].mxu0
  %157 = vdwg.mxu0
  %v158 = vld [vmem:[%s4] sm:$0x3]
  %v160 = vlaneseq
  %v161 = vshrl.u32 %v160, 7
  %v162 = vsub.s32 0, %v161
  %v163 = vrot.slane %v158, %v162
  %v164 = vlaneseq
  %v165 = vshrl.u32 %v164, 7
  %v166 = vsub.s32 1, %v165
  %v167 = vrot.slane %v158, %v166
  %v170 = vadd.f32 %v152, %v163
  %v171 = vadd.f32 %v154, %v167
  %v172 = vmax.f32 %v170, 0.0
  %v173 = vmax.f32 %v171, 0.0
  %v174 = vpack.c.bf16 %v172, %v172
  %v175 = vpack.c.bf16 %v173, %v173
  %v176 = vld [vmem:[%s5] sm:$0xf]
  %v177 = vld [vmem:[%s5 + $0x4] sm:$0xf]
  %v178 = vld [vmem:[%s5 + $0x8] sm:$0xf]
  %v179 = vld [vmem:[%s5 + $0xc] sm:$0xf]
  %v180 = vld [vmem:[%s5 + $0x10] sm:$0xf]
  %v181 = vld [vmem:[%s5 + $0x14] sm:$0xf]
  %v182 = vld [vmem:[%s5 + $0x18] sm:$0xf]
  %v183 = vld [vmem:[%s5 + $0x1c] sm:$0xf]
  %v184 = vld [vmem:[%s5 + $0x20] sm:$0xf]
  %v185 = vld [vmem:[%s5 + $0x24] sm:$0xf]
  %v186 = vld [vmem:[%s5 + $0x28] sm:$0xf]
  %v187 = vld [vmem:[%s5 + $0x2c] sm:$0xf]
  %v188 = vld [vmem:[%s5 + $0x30] sm:$0xf]
  %v189 = vld [vmem:[%s5 + $0x34] sm:$0xf]
  %v190 = vld [vmem:[%s5 + $0x38] sm:$0xf]
  %v191 = vld [vmem:[%s5 + $0x3c] sm:$0xf]
  %v192 = vld [vmem:[%s5 + $0x40] sm:$0xf]
  %v193 = vld [vmem:[%s5 + $0x44] sm:$0xf]
  %v194 = vld [vmem:[%s5 + $0x48] sm:$0xf]
  %v195 = vld [vmem:[%s5 + $0x4c] sm:$0xf]
  %v196 = vld [vmem:[%s5 + $0x50] sm:$0xf]
  %v197 = vld [vmem:[%s5 + $0x54] sm:$0xf]
  %v198 = vld [vmem:[%s5 + $0x58] sm:$0xf]
  %v199 = vld [vmem:[%s5 + $0x5c] sm:$0xf]
  %v200 = vld [vmem:[%s5 + $0x60] sm:$0xf]
  %v201 = vld [vmem:[%s5 + $0x64] sm:$0xf]
  %v202 = vld [vmem:[%s5 + $0x68] sm:$0xf]
  %v203 = vld [vmem:[%s5 + $0x6c] sm:$0xf]
  %v204 = vld [vmem:[%s5 + $0x70] sm:$0xf]
  %v205 = vld [vmem:[%s5 + $0x74] sm:$0xf]
  %v206 = vld [vmem:[%s5 + $0x78] sm:$0xf]
  %v207 = vld [vmem:[%s5 + $0x7c] sm:$0xf]
  %v208 = vld [vmem:[%s6] sm:$0x1]
  %v210 = vlaneseq
  %v211 = vshrl.u32 %v210, 7
  %v212 = vsub.s32 0, %v211
  %v213 = vrot.slane %v208, %v212
  %v247 = vunpack.c.l.b16 %v176
  %v248 = vunpack.c.l.b16 %v177
  %v249 = vunpack.c.l.b16 %v178
  %v250 = vunpack.c.l.b16 %v179
  %v251 = vunpack.c.l.b16 %v180
  %v252 = vunpack.c.l.b16 %v181
  %v253 = vunpack.c.l.b16 %v182
  %v254 = vunpack.c.l.b16 %v183
  %v255 = vunpack.c.l.b16 %v184
  %v256 = vunpack.c.l.b16 %v185
  %v257 = vunpack.c.l.b16 %v186
  %v258 = vunpack.c.l.b16 %v187
  %v259 = vunpack.c.l.b16 %v188
  %v260 = vunpack.c.l.b16 %v189
  %v261 = vunpack.c.l.b16 %v190
  %v262 = vunpack.c.l.b16 %v191
  %v263 = vunpack.c.l.b16 %v192
  %v264 = vunpack.c.l.b16 %v193
  %v265 = vunpack.c.l.b16 %v194
  %v266 = vunpack.c.l.b16 %v195
  %v267 = vunpack.c.l.b16 %v196
  %v268 = vunpack.c.l.b16 %v197
  %v269 = vunpack.c.l.b16 %v198
  %v270 = vunpack.c.l.b16 %v199
  %v271 = vunpack.c.l.b16 %v200
  %v272 = vunpack.c.l.b16 %v201
  %v273 = vunpack.c.l.b16 %v202
  %v274 = vunpack.c.l.b16 %v203
  %v275 = vunpack.c.l.b16 %v204
  %v276 = vunpack.c.l.b16 %v205
  %v277 = vunpack.c.l.b16 %v206
  %v278 = vunpack.c.l.b16 %v207
  %v279 = vpack.c.b16 %v248, %v247
  %v280 = vpack.c.b16 %v250, %v249
  %v281 = vpack.c.b16 %v252, %v251
  %v282 = vpack.c.b16 %v254, %v253
  %v283 = vpack.c.b16 %v256, %v255
  %v284 = vpack.c.b16 %v258, %v257
  %v285 = vpack.c.b16 %v260, %v259
  %v286 = vpack.c.b16 %v262, %v261
  %v287 = vpack.c.b16 %v264, %v263
  %v288 = vpack.c.b16 %v266, %v265
  %v289 = vpack.c.b16 %v268, %v267
  %v290 = vpack.c.b16 %v270, %v269
  %v291 = vpack.c.b16 %v272, %v271
  %v292 = vpack.c.b16 %v274, %v273
  %v293 = vpack.c.b16 %v276, %v275
  %v294 = vpack.c.b16 %v278, %v277
  %311 = vmatprep.subr.bf16.mxu0 0
  %312 = vmatpush1.bf16.msra.mxu0 %v279
  %313 = vmatprep.subr.bf16.mxu0 0
  %314 = vmatpush1.bf16.msra.mxu0 %v280
  %315 = vmatprep.subr.bf16.mxu0 0
  %316 = vmatpush1.bf16.msra.mxu0 %v281
  %317 = vmatprep.subr.bf16.mxu0 0
  %318 = vmatpush1.bf16.msra.mxu0 %v282
  %319 = vmatprep.subr.bf16.mxu0 0
  %320 = vmatpush1.bf16.msra.mxu0 %v283
  %321 = vmatprep.subr.bf16.mxu0 0
  %322 = vmatpush1.bf16.msra.mxu0 %v284
  %323 = vmatprep.subr.bf16.mxu0 0
  %324 = vmatpush1.bf16.msra.mxu0 %v285
  %325 = vmatprep.subr.bf16.mxu0 0
  %326 = vmatpush1.bf16.msra.mxu0 %v286
  %327 = vmatprep.subr.bf16.mxu0 0
  %328 = vmatpush1.bf16.msra.mxu0 %v287
  %329 = vmatprep.subr.bf16.mxu0 0
  %330 = vmatpush1.bf16.msra.mxu0 %v288
  %331 = vmatprep.subr.bf16.mxu0 0
  %332 = vmatpush1.bf16.msra.mxu0 %v289
  %333 = vmatprep.subr.bf16.mxu0 0
  %334 = vmatpush1.bf16.msra.mxu0 %v290
  %335 = vmatprep.subr.bf16.mxu0 0
  %336 = vmatpush1.bf16.msra.mxu0 %v291
  %337 = vmatprep.subr.bf16.mxu0 0
  %338 = vmatpush1.bf16.msra.mxu0 %v292
  %339 = vmatprep.subr.bf16.mxu0 0
  %340 = vmatpush1.bf16.msra.mxu0 %v293
  %341 = vmatprep.subr.bf16.mxu0 0
  %342 = vmatpush1.bf16.msra.mxu0 %v294
  %343 = vmatprep.mubr.bf16.mxu0 %v175
  %344 = vmatmul.mubr.bf16.gmra.mrb[0].mxu0 %v174
  %v345 = vpop.f32.mrb[0].mxu0
  %v346 = vadd.f32 %v213, %v345
  %v347 = vpop.f32.mrb[0].mxu0
  %v348 = vpop.f32.mrb[0].mxu0
  %v349 = vpop.f32.mrb[0].mxu0
  %350 = vdwg.mxu0
  %v351 = vtanh.pop %v346
  %v352 = vld [vmem:[%s7] sm:$0x1]
  %v354 = vlaneseq
  %v355 = vshrl.u32 %v354, 7
  %v356 = vsub.s32 0, %v355
  %v357 = vrot.slane %v352, %v356
  %v359 = vmul.f32 %v351, %v357
  %vm360 = vcmask 523264
  %v361 = vsel %vm360, %v359, 0.0
  %362 = vadd.xlane.f32.xlu0 %v361
  %v363 = vpop.xlane.xlu0 %362
  %v364 = vld [vmem:[#allocation2] sm:$0x1]
  %v366 = vlaneseq
  %v367 = vshrl.u32 %v366, 7
  %v368 = vsub.s32 0, %v367
  %v369 = vrot.slane %v364, %v368
  %v371 = vadd.f32 %v363, %v369
  %vm372 = vcmask 7168
  %373 = vst.msk [vmem:[%s9] sm:$0xff] %vm372, %v371
  // Predicated region
  $region38: #{critic_forward.1} parent=0 // pred_check
    _
  $region39: #{critic_forward.1} parent=0 // pred_check_branch
    %375 = sbr.rel (0) target = $region41
  $region40: #{critic_forward.1} parent=0 // pred_region
    _
  $region41: #{critic_forward.1} parent=0 // pred_fallthru
    _
  // Predicated region
  $region42: #{critic_forward.1} parent=0 // pred_check
    _
  $region43: #{critic_forward.1} parent=0 // pred_check_branch
    %377 = sbr.rel (0) target = $region45
  $region44: #{critic_forward.1} parent=0 // pred_region
    _
  $region45: #{critic_forward.1} parent=0 // pred_fallthru
    _

</llo_original>
